<compile_context>
chip_gen: v7x
topology: tpu7x:2x2x1
jax: 0.10.0
libtpu: 0.0.40
codegen_flags: <defaults>
</compile_context>

<pallas_src>
import functools

import jax
import jax.numpy as jnp
from jax.experimental import pallas as pl
from jax.experimental.pallas import tpu as pltpu


def _round_up(x, m):
    return (x + m - 1) // m * m


def proj_logsoftmax_kernel(x_ref, w_ref, b_ref, o_ref, m_sc, s_sc, *, vt):
    # x_ref: (tm, D)      row tile of activations (block index constant across the V axis)
    # w_ref: (D, vt)      streamed weight slab for vocab tile j
    # b_ref: (1, vt)      bias slab for vocab tile j (padded cols hold -1e30)
    # o_ref: (tm, V_pad)  resident output row-block; holds raw logits until the last j
    # m_sc : (tm, 1) f32  running max
    # s_sc : (tm, 1) f32  running sum of exp(logit - max)
    j = pl.program_id(1)

    @pl.when(j == 0)
    def _():
        m_sc[...] = jnp.full_like(m_sc, -jnp.inf)
        s_sc[...] = jnp.zeros_like(s_sc)

    logits = jnp.dot(x_ref[...], w_ref[...],
                     preferred_element_type=jnp.float32) + b_ref[...]

    # Stash raw logits for this vocab slab into the resident output block.
    col = pl.multiple_of(j * vt, vt)
    o_ref[:, pl.ds(col, vt)] = logits.astype(o_ref.dtype)

    # Online logsumexp statistics.
    m_old = m_sc[...]
    m_new = jnp.maximum(m_old, jnp.max(logits, axis=-1, keepdims=True))
    s_sc[...] = (s_sc[...] * jnp.exp(m_old - m_new)
                 + jnp.sum(jnp.exp(logits - m_new), axis=-1, keepdims=True))
    m_sc[...] = m_new

    # Last vocab tile: one fused normalization pass over the whole row-block.
    @pl.when(j == pl.num_programs(1) - 1)
    def _():
        norm = m_sc[...] + jnp.log(s_sc[...])                     # (tm, 1)
        o_ref[...] = (o_ref[...].astype(jnp.float32) - norm).astype(o_ref.dtype)


def projection_layer(x, weight, bias, *, tm=256, vt=512, matmul_dtype=None):
    """log_softmax(x @ weight.T + bias, axis=-1).

    x: (B, S, D); weight: (V, D) [PyTorch nn.Linear layout]; bias: (V,).
    Returns (B, S, V) log-probabilities in x.dtype.
    """
    B, S, D = x.shape
    V, Dw = weight.shape
    assert Dw == D, "weight must be (vocab, d_model)"
    M = B * S
    out_dtype = x.dtype

    # --- tile sizes (clamped for small problems; vt must be a lane multiple) ---
    assert vt % 128 == 0 and tm % 8 == 0
    tm = min(tm, _round_up(M, 8))
    vt = min(vt, _round_up(V, 128))
    M_pad = _round_up(M, tm)
    V_pad = _round_up(V, vt)

    # --- prep / padding.  NOTE: in a real model pre-transpose (and pre-pad) the
    #     weight once outside the hot path instead of per call. ---
    w_t = weight.T                                     # (D, V)
    if matmul_dtype is not None:
        w_t = w_t.astype(matmul_dtype)
        x = x.astype(matmul_dtype)
    x2d = x.reshape(M, D)
    if M_pad != M:
        x2d = jnp.pad(x2d, ((0, M_pad - M), (0, 0)))
    if V_pad != V:
        w_t = jnp.pad(w_t, ((0, 0), (0, V_pad - V)))
        bias = jnp.pad(bias, (0, V_pad - V), constant_values=-1e30)  # masked vocab cols
    b2d = bias.reshape(1, V_pad).astype(jnp.float32)

    grid = (M_pad // tm, V_pad // vt)

    x_bytes = jnp.dtype(x2d.dtype).itemsize
    w_bytes = jnp.dtype(w_t.dtype).itemsize
    o_bytes = jnp.dtype(out_dtype).itemsize

    # Double-buffered input slabs + resident (double-buffered) output block + scratch.
    vmem_est = (2 * tm * D * x_bytes
                + 2 * D * vt * w_bytes
                + 2 * vt * 4
                + 2 * tm * V_pad * o_bytes
                + 4 * tm * 4
                + (2 << 20))
    vmem_limit = int(min(max(vmem_est, 32 * 1024 * 1024), 64 * 1024 * 1024))

    cost = pl.CostEstimate(
        flops=2 * M * D * V,
        transcendentals=M * V,
        bytes_accessed=(M * D * x_bytes
                        + (M_pad // tm) * D * V_pad * w_bytes
                        + M * V * o_bytes),
    )

    kernel = functools.partial(proj_logsoftmax_kernel, vt=vt)

    out2d = pl.pallas_call(
        kernel,
        out_shape=jax.ShapeDtypeStruct((M_pad, V_pad), out_dtype),
        grid_spec=pltpu.PrefetchScalarGridSpec(
            num_scalar_prefetch=0,
            grid=grid,
            in_specs=[
                pl.BlockSpec((tm, D), lambda i, j: (i, 0)),   # row tile (reused across j)
                pl.BlockSpec((D, vt), lambda i, j: (0, j)),   # streamed weight slab
                pl.BlockSpec((1, vt), lambda i, j: (0, j)),   # streamed bias slab
            ],
            out_specs=pl.BlockSpec((tm, V_pad), lambda i, j: (i, 0)),  # resident row-block
            scratch_shapes=[pltpu.VMEM((tm, 1), jnp.float32),   # running max
                            pltpu.VMEM((tm, 1), jnp.float32)],  # running sum
        ),
        compiler_params=pltpu.CompilerParams(
            dimension_semantics=("parallel", "arbitrary"),
            vmem_limit_bytes=vmem_limit,
        ),
        cost_estimate=cost,
    )(x2d, w_t, b2d)

    return out2d[:M, :V].reshape(B, S, V)


if __name__ == "__main__":
    # Small shapes consistent with the module: (batch, seq, d_model) -> (batch, seq, vocab).
    # V=320 is deliberately not a multiple of the 128-wide vocab tile, and vt=128 forces
    # multiple vocab tiles so the online-logsumexp / padding paths are exercised.
    B, S, D, V = 2, 8, 32, 320

    key = jax.random.PRNGKey(0)
    kx, kw, kb = jax.random.split(key, 3)

    x = jax.random.normal(kx, (B, S, D), dtype=jnp.float32)
    bound = 1.0 / (D ** 0.5)  # mimic nn.Linear's uniform(-1/sqrt(D), 1/sqrt(D)) init
    weight = jax.random.uniform(kw, (V, D), dtype=jnp.float32, minval=-bound, maxval=bound)
    bias = jax.random.uniform(kb, (V,), dtype=jnp.float32, minval=-bound, maxval=bound)

    out = projection_layer(x, weight, bias, vt=128)
    out = jax.block_until_ready(out)

    # Sanity check against plain-JAX reference.
    ref = jax.nn.log_softmax(x @ weight.T + bias, axis=-1)
    assert out.shape == (B, S, V)
    assert jnp.allclose(out, ref, atol=1e-5, rtol=1e-5), "mismatch vs reference"

    print("KERNEL_OK")
</pallas_src>

<mosaic_0001>
module attributes {stable_mosaic.version = 11 : i64} {
  func.func @proj_logsoftmax_kernel(%arg0: i32, %arg1: i32, %arg2: memref<16x32xf32, #tpu.memory_space<vmem>>, %arg3: memref<32x128xf32, #tpu.memory_space<vmem>>, %arg4: memref<1x128xf32, #tpu.memory_space<vmem>>, %arg5: memref<16x384xf32, #tpu.memory_space<vmem>>, %arg6: memref<16x1xf32, #tpu.memory_space<vmem>>, %arg7: memref<16x1xf32, #tpu.memory_space<vmem>>) attributes {dimension_semantics = [#tpu.dimension_semantics<parallel>, #tpu.dimension_semantics<arbitrary>], iteration_bounds = array<i64: 1, 3>, scalar_prefetch = 0 : i64, scratch_operands = 2 : i64, tpu.core_type = #tpu.core_type<tc>, window_params = [{transform_indices = @transform_0, window_bounds = array<i64: 16, 32>}, {transform_indices = @transform_1, window_bounds = array<i64: 32, 128>}, {transform_indices = @transform_2, window_bounds = array<i64: 1, 128>}, {transform_indices = @transform_3, window_bounds = array<i64: 16, 384>}]} {
    %c0_i32 = arith.constant 0 : i32
    %0 = arith.cmpi eq, %arg1, %c0_i32 : i32
    %1 = arith.extui %0 : i1 to i32
    %c0_i32_0 = arith.constant 0 : i32
    %2 = arith.cmpi ne, %1, %c0_i32_0 : i32
    scf.if %2 {
      %cst_18 = arith.constant 0xFF800000 : f32
      %32 = vector.broadcast %cst_18 : f32 to vector<16x1xf32>
      %c0_19 = arith.constant 0 : index
      %c0_20 = arith.constant 0 : index
      %33 = vector.load %arg6[%c0_19, %c0_20] : memref<16x1xf32, #tpu.memory_space<vmem>>, vector<16x1xf32>
      tpu.vector_store %arg6[%c0_19, %c0_20], %32 {strides = array<i32>} : memref<16x1xf32, #tpu.memory_space<vmem>>, vector<16x1xf32>,
      %cst_21 = arith.constant 0.000000e+00 : f32
      %34 = vector.broadcast %cst_21 : f32 to vector<16x1xf32>
      %c0_22 = arith.constant 0 : index
      %c0_23 = arith.constant 0 : index
      %35 = vector.load %arg7[%c0_22, %c0_23] : memref<16x1xf32, #tpu.memory_space<vmem>>, vector<16x1xf32>
      tpu.vector_store %arg7[%c0_22, %c0_23], %34 {strides = array<i32>} : memref<16x1xf32, #tpu.memory_space<vmem>>, vector<16x1xf32>,
    } else {
    }
    %c0 = arith.constant 0 : index
    %c0_1 = arith.constant 0 : index
    %3 = vector.load %arg2[%c0, %c0_1] : memref<16x32xf32, #tpu.memory_space<vmem>>, vector<16x32xf32>
    %c0_2 = arith.constant 0 : index
    %c0_3 = arith.constant 0 : index
    %4 = vector.load %arg3[%c0_2, %c0_3] : memref<32x128xf32, #tpu.memory_space<vmem>>, vector<32x128xf32>
    %cst = arith.constant dense<0.000000e+00> : vector<16x128xf32>
    %5 = tpu.matmul %3, %4, %cst {dimension_numbers = #tpu.dot_dimension_numbers<[1], [0], [0], [1], [0, 0, 1, 1], [], []>} : vector<16x32xf32>, vector<32x128xf32>, vector<16x128xf32> -> vector<16x128xf32>
    %c0_4 = arith.constant 0 : index
    %c0_5 = arith.constant 0 : index
    %6 = vector.load %arg4[%c0_4, %c0_5] : memref<1x128xf32, #tpu.memory_space<vmem>>, vector<1x128xf32>
    %7 = vector.broadcast %6 : vector<1x128xf32> to vector<16x128xf32>
    %8 = arith.addf %5, %7 : vector<16x128xf32>
    %c128_i32 = arith.constant 128 : i32
    %9 = arith.muli %arg1, %c128_i32 : i32
    %10 = tpu.assume_multiple %9, 128 : i32
    %c0_6 = arith.constant 0 : index
    %11 = arith.index_cast %10 : i32 to index
    %12 = vector.load %arg5[%c0_6, %11] : memref<16x384xf32, #tpu.memory_space<vmem>>, vector<16x128xf32>
    tpu.vector_store %arg5[%c0_6, %11], %8 {strides = array<i32>} : memref<16x384xf32, #tpu.memory_space<vmem>>, vector<16x128xf32>,
    %c0_7 = arith.constant 0 : index
    %c0_8 = arith.constant 0 : index
    %13 = vector.load %arg6[%c0_7, %c0_8] : memref<16x1xf32, #tpu.memory_space<vmem>>, vector<16x1xf32>
    %cst_9 = arith.constant dense<0xFF800000> : vector<16xf32>
    %14 = vector.multi_reduction <maximumf>, %8, %cst_9 [1] : vector<16x128xf32> to vector<16xf32>
    %15 = vector.shape_cast %14 : vector<16xf32> to vector<16x1xf32>
    %16 = arith.maximumf %13, %15 : vector<16x1xf32>
    %c0_10 = arith.constant 0 : index
    %c0_11 = arith.constant 0 : index
    %17 = vector.load %arg7[%c0_10, %c0_11] : memref<16x1xf32, #tpu.memory_space<vmem>>, vector<16x1xf32>
    %18 = arith.subf %13, %16 : vector<16x1xf32>
    %19 = math.exp %18 : vector<16x1xf32>
    %20 = arith.mulf %17, %19 : vector<16x1xf32>
    %21 = vector.broadcast %16 : vector<16x1xf32> to vector<16x128xf32>
    %22 = arith.subf %8, %21 : vector<16x128xf32>
    %23 = math.exp %22 : vector<16x128xf32>
    %cst_12 = arith.constant dense<0.000000e+00> : vector<16xf32>
    %24 = vector.multi_reduction <add>, %23, %cst_12 [1] : vector<16x128xf32> to vector<16xf32>
    %25 = vector.shape_cast %24 : vector<16xf32> to vector<16x1xf32>
    %26 = arith.addf %20, %25 : vector<16x1xf32>
    %c0_13 = arith.constant 0 : index
    %c0_14 = arith.constant 0 : index
    %27 = vector.load %arg7[%c0_13, %c0_14] : memref<16x1xf32, #tpu.memory_space<vmem>>, vector<16x1xf32>
    tpu.vector_store %arg7[%c0_13, %c0_14], %26 {strides = array<i32>} : memref<16x1xf32, #tpu.memory_space<vmem>>, vector<16x1xf32>,
    %c0_15 = arith.constant 0 : index
    %c0_16 = arith.constant 0 : index
    %28 = vector.load %arg6[%c0_15, %c0_16] : memref<16x1xf32, #tpu.memory_space<vmem>>, vector<16x1xf32>
    tpu.vector_store %arg6[%c0_15, %c0_16], %16 {strides = array<i32>} : memref<16x1xf32, #tpu.memory_space<vmem>>, vector<16x1xf32>,
    %c2_i32 = arith.constant 2 : i32
    %29 = arith.cmpi eq, %arg1, %c2_i32 : i32
    %30 = arith.extui %29 : i1 to i32
    %c0_i32_17 = arith.constant 0 : i32
    %31 = arith.cmpi ne, %30, %c0_i32_17 : i32
    scf.if %31 {
      %c0_18 = arith.constant 0 : index
      %c0_19 = arith.constant 0 : index
      %32 = vector.load %arg6[%c0_18, %c0_19] : memref<16x1xf32, #tpu.memory_space<vmem>>, vector<16x1xf32>
      %c0_20 = arith.constant 0 : index
      %c0_21 = arith.constant 0 : index
      %33 = vector.load %arg7[%c0_20, %c0_21] : memref<16x1xf32, #tpu.memory_space<vmem>>, vector<16x1xf32>
      %34 = math.log %33 : vector<16x1xf32>
      %35 = arith.addf %32, %34 : vector<16x1xf32>
      %c0_22 = arith.constant 0 : index
      %c0_23 = arith.constant 0 : index
      %36 = vector.load %arg5[%c0_22, %c0_23] : memref<16x384xf32, #tpu.memory_space<vmem>>, vector<16x384xf32>
      %37 = vector.broadcast %35 : vector<16x1xf32> to vector<16x384xf32>
      %38 = arith.subf %36, %37 : vector<16x384xf32>
      %c0_24 = arith.constant 0 : index
      %c0_25 = arith.constant 0 : index
      %39 = vector.load %arg5[%c0_24, %c0_25] : memref<16x384xf32, #tpu.memory_space<vmem>>, vector<16x384xf32>
      tpu.vector_store %arg5[%c0_24, %c0_25], %38 {strides = array<i32>} : memref<16x384xf32, #tpu.memory_space<vmem>>, vector<16x384xf32>,
    } else {
    }
    return
  }
  func.func @transform_0(%arg0: i32, %arg1: i32) -> (i32, i32) {
    %c0_i32 = arith.constant 0 : i32
    %c0_i32_0 = arith.constant 0 : i32
    return %arg0, %c0_i32 : i32, i32
  }
  func.func @transform_1(%arg0: i32, %arg1: i32) -> (i32, i32) {
    %c0_i32 = arith.constant 0 : i32
    %c0_i32_0 = arith.constant 0 : i32
    return %c0_i32, %arg1 : i32, i32
  }
  func.func @transform_2(%arg0: i32, %arg1: i32) -> (i32, i32) {
    %c0_i32 = arith.constant 0 : i32
    %c0_i32_0 = arith.constant 0 : i32
    return %c0_i32, %arg1 : i32, i32
  }
  func.func @transform_3(%arg0: i32, %arg1: i32) -> (i32, i32) {
    %c0_i32 = arith.constant 0 : i32
    %c0_i32_0 = arith.constant 0 : i32
    return %arg0, %c0_i32 : i32, i32
  }
}

</mosaic_0001>

<llo_original>
// kernel: tpu_custom_call.1
$region0: #{tpu_custom_call.1}
  #allocation0 [shape = 'u32[]', space=smem, size = 0x4, offset = 0x4, fixed_abs, tag = 'smem constant byte address 0x4 - core index']
  #allocation1 [shape = 'u32[144,128]{1,0:T(1,128)}', space=vmem, size = 0x12000, scoped, tag = 'internal scratch']
  #allocation2 [shape = 'f32[16,1]{1,0:T(8,128)}', space=vmem, size = 0x2000, scoped, tag = 'scratch operand']
  #allocation3 [shape = 'f32[16,1]{1,0:T(8,128)}', space=vmem, size = 0x2000, scoped, tag = 'scratch operand']
  %s0 = inlined_call_operand.hbm [shape: f32[16,32], index: 0, kind: input, shape index: {}]
  %s1 = inlined_call_operand.hbm [shape: f32[32,384], index: 1, kind: input, shape index: {}]
  %s2 = inlined_call_operand.vmem [shape: f32[1,384], index: 2, kind: input, shape index: {}]
  %s3 = inlined_call_operand.hbm [shape: f32[16,384], index: 3, kind: output, shape index: {}]
  %s4 = sld [smem:[#allocation0]]
  $region61: #{tpu_custom_call.1} parent=0
    _
  %s6 = ssub.s32 1, %s4
  %s7 = scalar_select 0, %s6, %s4
  $region1: #{tpu_custom_call.1} parent=0
    #allocation4 [shape = 'u8[8192]{0}', space=vmem, size = 0x2000, scoped, tag = 'input window, operand 0, single buffered']
    #allocation5 [shape = 's32[2]{0}', space=sflag, size = 0x8, scoped, tag = 'scoped memory for tpu_custom_call.1']
    #allocation6 [shape = 's32[2]{0}', space=sflag, size = 0x8, scoped, tag = 'scoped memory for tpu_custom_call.1']
    #allocation7 [shape = 'u8[32768]{0}', space=vmem, size = 0x8000, scoped, tag = 'input window, operand 1']
    #allocation8 [shape = 's32[2]{0}', space=sflag, size = 0x8, scoped, tag = 'scoped memory for tpu_custom_call.1']
    #allocation9 [shape = 'u8[24576]{0}', space=vmem, size = 0x6000, scoped, tag = 'output window, operand 0, single buffered']
    %8 = vsyncpa [#allocation5], 0
    %9 = vsyncpa [#allocation8], 0
    %s10 = scalar_lea.sflag [#allocation8], 1
    %11 = vsyncpa %s10, 0
    %12 = vsyncpa [#allocation6], 0
    loop: start=0, step=1, limit=5
    $region2: #{tpu_custom_call.1} parent=1 // loop_pre_header
      _
    $region3: #{tpu_custom_call.1} parent=1 // loop_header
      %s14 = sphi 0, %s18
      %p15 = scmp.ge.s32.totalorder %s14, 5
      %s21 = sphi 0, %s33
      %s22 = sphi 0, %s29
      %s23 = sphi 0, %s21
      %s24 = sphi 0, %s22
      %s25 = sphi 0, %s23
      %s26 = sphi 0, %s24
      %s36 = sphi 0, %s38
      %s39 = sphi 0, %s36
      %s40 = sphi 0, %s39
      %s56 = sphi 0, %s40
      %s62 = sphi 0, %s64
      %s65 = sphi 0, %s62
      %s66 = sphi 0, %s65
      %s82 = sphi 0, %s66
      %s88 = sphi 0, %s90
      %s91 = sphi 0, %s88
      %s92 = sphi 0, %s91
      %s108 = sphi 0, %s92
      %s114 = sphi 0, %s116
      %s117 = sphi 0, %s114
      %s118 = sphi 0, %s117
      %s134 = sphi 0, %s118
    $region4: #{tpu_custom_call.1} parent=1 // loop_header_branch
      %17 = sbr.rel (%p15) target = $region8
    $region5: #{tpu_custom_call.1} parent=1 // loop_body
      %s19 = ssub.s32 %s14, 1
      %s20 = ssub.s32 %s14, 2
      %s27 = sadd.s32 1, %s22
      %p28 = scmp.ge.s32.totalorder %s27, 3
      %s29 = scalar_select %p28, 0, %s27
      %s30 = sadd.s32 1, %s21
      %s31 = scalar_select %p28, %s30, %s21
      %p32 = scmp.ge.s32.totalorder %s31, 1
      %s33 = scalar_select %p32, 0, %s31
      %s34 = ssub.s32 %s21, %s33
      %p35 = scmp.eq.s32.totalorder %s34, 0
      %s37 = sadd.s32 %s36, 1
      %s38 = scalar_select %p35, %s36, %s37
      %p41 = pneg %p35
      %p42 = scmp.eq.s32.totalorder %s14, 2
      %p43 = por %p41, %p42
      %p44 = scmp.ne.s32.totalorder %s36, %s39
      %p45 = scmp.eq.s32.totalorder %s14, 0
      %p46 = por %p44, %p45
      %p47 = scmp.ne.s32.totalorder %s36, %s39
      %p48 = scmp.eq.s32.totalorder %s19, 2
      %p49 = por %p47, %p48
      %p50 = scmp.ne.s32.totalorder %s39, %s40
      %p51 = scmp.eq.s32.totalorder %s19, 0
      %p52 = por %p50, %p51
      %p53 = scmp.ne.s32.totalorder %s39, %s40
      %p54 = scmp.eq.s32.totalorder %s20, 2
      %p55 = por %p53, %p54
      %p57 = scmp.ne.s32.totalorder %s40, %s56
      %p58 = scmp.eq.s32.totalorder %s20, 0
      %p59 = por %p57, %p58
      %s60 = ssub.s32 %s22, %s29
      %p61 = scmp.eq.s32.totalorder %s60, 0
      %s63 = sadd.s32 %s62, 1
      %s64 = scalar_select %p61, %s62, %s63
      %p67 = pneg %p61
      %p68 = scmp.eq.s32.totalorder %s14, 2
      %p69 = por %p67, %p68
      %p70 = scmp.ne.s32.totalorder %s62, %s65
      %p71 = scmp.eq.s32.totalorder %s14, 0
      %p72 = por %p70, %p71
      %p73 = scmp.ne.s32.totalorder %s62, %s65
      %p74 = scmp.eq.s32.totalorder %s19, 2
      %p75 = por %p73, %p74
      %p76 = scmp.ne.s32.totalorder %s65, %s66
      %p77 = scmp.eq.s32.totalorder %s19, 0
      %p78 = por %p76, %p77
      %p79 = scmp.ne.s32.totalorder %s65, %s66
      %p80 = scmp.eq.s32.totalorder %s20, 2
      %p81 = por %p79, %p80
      %p83 = scmp.ne.s32.totalorder %s66, %s82
      %p84 = scmp.eq.s32.totalorder %s20, 0
      %p85 = por %p83, %p84
      %s86 = ssub.s32 %s22, %s29
      %p87 = scmp.eq.s32.totalorder %s86, 0
      %s89 = sadd.s32 %s88, 1
      %s90 = scalar_select %p87, %s88, %s89
      %p93 = pneg %p87
      %p94 = scmp.eq.s32.totalorder %s14, 2
      %p95 = por %p93, %p94
      %p96 = scmp.ne.s32.totalorder %s88, %s91
      %p97 = scmp.eq.s32.totalorder %s14, 0
      %p98 = por %p96, %p97
      %p99 = scmp.ne.s32.totalorder %s88, %s91
      %p100 = scmp.eq.s32.totalorder %s19, 2
      %p101 = por %p99, %p100
      %p102 = scmp.ne.s32.totalorder %s91, %s92
      %p103 = scmp.eq.s32.totalorder %s19, 0
      %p104 = por %p102, %p103
      %p105 = scmp.ne.s32.totalorder %s91, %s92
      %p106 = scmp.eq.s32.totalorder %s20, 2
      %p107 = por %p105, %p106
      %p109 = scmp.ne.s32.totalorder %s92, %s108
      %p110 = scmp.eq.s32.totalorder %s20, 0
      %p111 = por %p109, %p110
      %s112 = ssub.s32 %s21, %s33
      %p113 = scmp.eq.s32.totalorder %s112, 0
      %s115 = sadd.s32 %s114, 1
      %s116 = scalar_select %p113, %s114, %s115
      %p119 = pneg %p113
      %p120 = scmp.eq.s32.totalorder %s14, 2
      %p121 = por %p119, %p120
      %p122 = scmp.ne.s32.totalorder %s114, %s117
      %p123 = scmp.eq.s32.totalorder %s14, 0
      %p124 = por %p122, %p123
      %p125 = scmp.ne.s32.totalorder %s114, %s117
      %p126 = scmp.eq.s32.totalorder %s19, 2
      %p127 = por %p125, %p126
      %p128 = scmp.ne.s32.totalorder %s117, %s118
      %p129 = scmp.eq.s32.totalorder %s19, 0
      %p130 = por %p128, %p129
      %p131 = scmp.ne.s32.totalorder %s117, %s118
      %p132 = scmp.eq.s32.totalorder %s20, 2
      %p133 = por %p131, %p132
      %p135 = scmp.ne.s32.totalorder %s118, %s134
      %p136 = scmp.eq.s32.totalorder %s20, 0
      %p137 = por %p135, %p136
      %p138 = scmp.le.s32.totalorder 1, %s14
      %p139 = scmp.lt.s32.totalorder %s14, 4
      %p140 = pnand %p138, %p139
      %p141 = pneg %p140
      // Predicated region
      $region9: #{tpu_custom_call.1} parent=5 // pred_check
        _
      $region10: #{tpu_custom_call.1} parent=5 // pred_check_branch
        %143 = sbr.rel (%p140) target = $region12
      $region11: #{tpu_custom_call.1} parent=5 // pred_region
        %s144 = ssub.s32 %s14, 1
        // Predicated region
        $region13: #{tpu_custom_call.1} parent=11 // pred_check
          %p145 = pneg %p52
        $region14: #{tpu_custom_call.1} parent=11 // pred_check_branch
          %147 = sbr.rel (%p145) target = $region16
        $region15: #{tpu_custom_call.1} parent=11 // pred_region
          %s148 = smul.u32 2, %s23
          %s150 = ssub.s32 256, 256
          %151 = vsyncadd [#allocation5], %s150
          %s152 = smul.addr %s148, 128
          %s153 = scalar_lea.hbm %s0, %s152
          %s154 = sshll.u32 [#allocation4], 4
          %s155 = int_to_ptr.vmem [resolvable:$true] %s154
          %160 = dma.hbm_to_vmem [thread:$0]  %s153, 256, %s155, [#allocation5], 128, 128, 8
        $region16: #{tpu_custom_call.1} parent=11 // pred_fallthru
          _
      $region12: #{tpu_custom_call.1} parent=5 // pred_fallthru
        _
      %p161 = scmp.lt.s32.totalorder %s14, 3
      // Predicated region
      $region17: #{tpu_custom_call.1} parent=5 // pred_check
        %p162 = pneg %p161
      $region18: #{tpu_custom_call.1} parent=5 // pred_check_branch
        %164 = sbr.rel (%p162) target = $region20
      $region19: #{tpu_custom_call.1} parent=5 // pred_region
        // Predicated region
        $region21: #{tpu_custom_call.1} parent=19 // pred_check
          %p165 = pneg %p72
        $region22: #{tpu_custom_call.1} parent=19 // pred_check_branch
          %167 = sbr.rel (%p165) target = $region24
        $region23: #{tpu_custom_call.1} parent=19 // pred_region
          %s168 = sand.u32 %s62, 1
          %s169 = scalar_lea.sflag [#allocation8], %s168
          %s170 = sand.u32 %s62, 1
          %s171 = smul.addr %s170, 32
          %s172 = scalar_lea.vmem [#allocation7], %s171
          %s174 = ssub.s32 512, 512
          %175 = vsyncadd %s169, %s174
          %s176 = smul.addr %s22, 128
          %s177 = scalar_lea.hbm %s1, %s176
          %s178 = sshll.u32 %s172, 4
          %s179 = int_to_ptr.vmem [resolvable:$true] %s178
          %184 = dma.hbm_to_vmem [thread:$0]  %s177, 512, %s179, %s169, 384, 128, 8
        $region24: #{tpu_custom_call.1} parent=19 // pred_fallthru
          _
        // Predicated region
        $region25: #{tpu_custom_call.1} parent=19 // pred_check
          %p185 = pneg %p98
        $region26: #{tpu_custom_call.1} parent=19 // pred_check_branch
          %187 = sbr.rel (%p185) target = $region28
        $region27: #{tpu_custom_call.1} parent=19 // pred_region
          %p188 = scmp.lt.s32.totalorder %s22, 2
          %s189 = scalar_select %p188, %s22, 2
          %s190 = scalar_lea.vmem %s2, %s189
        $region28: #{tpu_custom_call.1} parent=19 // pred_fallthru
          _
      $region20: #{tpu_custom_call.1} parent=5 // pred_fallthru
        _
      %p191 = scmp.le.s32.totalorder 1, %s14
      %p192 = scmp.lt.s32.totalorder %s14, 4
      %p193 = pnand %p191, %p192
      %p194 = pneg %p193
      // Predicated region
      $region29: #{tpu_custom_call.1} parent=5 // pred_check
        _
      $region30: #{tpu_custom_call.1} parent=5 // pred_check_branch
        %196 = sbr.rel (%p193) target = $region32
      $region31: #{tpu_custom_call.1} parent=5 // pred_region
        %s197 = ssub.s32 %s14, 1
        // Predicated region
        $region33: #{tpu_custom_call.1} parent=31 // pred_check
          %p198 = pneg %p52
        $region34: #{tpu_custom_call.1} parent=31 // pred_check_branch
          %200 = sbr.rel (%p198) target = $region36
        $region35: #{tpu_custom_call.1} parent=31 // pred_region
          %201 = dma.done [#allocation5], 256
        $region36: #{tpu_custom_call.1} parent=31 // pred_fallthru
          _
        %s202 = sand.u32 %s65, 1
        %s203 = scalar_lea.sflag [#allocation8], %s202
        %s204 = sand.u32 %s65, 1
        %s205 = smul.addr %s204, 32
        %s206 = scalar_lea.vmem [#allocation7], %s205
        // Predicated region
        $region37: #{tpu_custom_call.1} parent=31 // pred_check
          %p207 = pneg %p78
        $region38: #{tpu_custom_call.1} parent=31 // pred_check_branch
          %209 = sbr.rel (%p207) target = $region40
        $region39: #{tpu_custom_call.1} parent=31 // pred_region
          %210 = dma.done %s203, 512
        $region40: #{tpu_custom_call.1} parent=31 // pred_fallthru
          _
        %p211 = pneg %p52
        %p212 = pneg %p49
        %s213 = sand.u32 %s65, 1
        %s214 = scalar_lea.sflag [#allocation8], %s213
        %s215 = sand.u32 %s65, 1
        %s216 = smul.addr %s215, 32
        %s217 = scalar_lea.vmem [#allocation7], %s216
        %p218 = pneg %p78
        %p219 = pneg %p75
        %p220 = scmp.lt.s32.totalorder %s24, 2
        %s221 = scalar_select %p220, %s24, 2
        %s222 = scalar_lea.vmem %s2, %s221
        %p223 = pneg %p104
        %p224 = pneg %p101
        %p225 = pneg %p130
        %p226 = pneg %p127
        %s227 = smul.u32 2, %s23
        %p228 = scmp.lt.s32.totalorder %s24, 2
        %s229 = scalar_select %p228, %s24, 2
        %s230 = scalar_lea.vmem %s2, %s229
        %s231 = smul.u32 2, %s23
        %p232 = scmp.eq.s32.totalorder %s24, 0
        // Predicated region
        $region41: #{tpu_custom_call.1} parent=31 // pred_check
          %p233 = pneg %p232
        $region42: #{tpu_custom_call.1} parent=31 // pred_check_branch
          %235 = sbr.rel (%p233) target = $region44
        $region43: #{tpu_custom_call.1} parent=31 // pred_region
          %vm236 = vcmask 7168
          %237 = vst.msk [vmem:[#allocation2] sm:$0xff] %vm236, -inf
          %238 = vst.msk [vmem:[#allocation2 + $0x8] sm:$0xff] %vm236, -inf
          %239 = vst.msk [vmem:[#allocation3] sm:$0xff] %vm236, 0.0
          %240 = vst.msk [vmem:[#allocation3 + $0x8] sm:$0xff] %vm236, 0.0
        $region44: #{tpu_custom_call.1} parent=31 // pred_fallthru
          _
        %v241 = vld [vmem:[#allocation4] sm:$0xff]
        %v242 = vld [vmem:[#allocation4 + $0x8] sm:$0xff]
        %v243 = vld [vmem:[%s206] sm:$0xff]
        %v244 = vld [vmem:[%s206 + $0x8] sm:$0xff]
        %v245 = vld [vmem:[%s206 + $0x10] sm:$0xff]
        %v246 = vld [vmem:[%s206 + $0x18] sm:$0xff]
        %v247 = vld [vmem:[%s230] sm:$0x1]
        %v249 = vlaneseq
        %v250 = vshrl.u32 %v249, 7
        %v251 = vsub.s32 0, %v250
        %v252 = vrot.slane %v247, %v251
        %vm254 = vcmask 261120
        %v256 = vsel %vm254, %v241, 0
        %v259 = vsel %vm254, %v242, 0
        %261 = vmatprep.subr.mxu0 0.0
        %262 = vmatpush1.msra.mxu0 %v243
        %263 = vmatprep.subr.mxu0 0.0
        %264 = vmatpush1.msra.mxu0 %v244
        %265 = vmatprep.subr.mxu0 0.0
        %266 = vmatpush1.msra.mxu0 %v245
        %267 = vmatprep.subr.mxu0 0.0
        %268 = vmatpush1.msra.mxu0 %v246
        %269 = vmatprep.subr.mxu0 0.0
        %270 = vmatpush1.msra.mxu0 0.0
        %271 = vmatprep.subr.mxu0 0.0
        %272 = vmatpush1.msra.mxu0 0.0
        %273 = vmatprep.subr.mxu0 0.0
        %274 = vmatpush1.msra.mxu0 0.0
        %275 = vmatprep.subr.mxu0 0.0
        %276 = vmatpush1.msra.mxu0 0.0
        %277 = vmatprep.subr.mxu0 0.0
        %278 = vmatpush1.msra.mxu0 0.0
        %279 = vmatprep.subr.mxu0 0.0
        %280 = vmatpush1.msra.mxu0 0.0
        %281 = vmatprep.subr.mxu0 0.0
        %282 = vmatpush1.msra.mxu0 0.0
        %283 = vmatprep.subr.mxu0 0.0
        %284 = vmatpush1.msra.mxu0 0.0
        %285 = vmatprep.subr.mxu0 0.0
        %286 = vmatpush1.msra.mxu0 0.0
        %287 = vmatprep.subr.mxu0 0.0
        %288 = vmatpush1.msra.mxu0 0.0
        %289 = vmatprep.subr.mxu0 0.0
        %290 = vmatpush1.msra.mxu0 0.0
        %291 = vmatprep.subr.mxu0 0.0
        %292 = vmatpush1.msra.mxu0 0.0
        %293 = vmatprep.subr.mxu0 0.0
        %294 = vmatpush1.msra.mxu0 0.0
        %295 = vmatprep.subr.mxu0 0.0
        %296 = vmatpush1.msra.mxu0 0.0
        %297 = vmatprep.subr.mxu0 0.0
        %298 = vmatpush1.msra.mxu0 0.0
        %299 = vmatprep.subr.mxu0 0.0
        %300 = vmatpush1.msra.mxu0 0.0
        %301 = vmatprep.subr.mxu0 0.0
        %302 = vmatpush1.msra.mxu0 0.0
        %303 = vmatprep.subr.mxu0 0.0
        %304 = vmatpush1.msra.mxu0 0.0
        %305 = vmatprep.subr.mxu0 0.0
        %306 = vmatpush1.msra.mxu0 0.0
        %307 = vmatprep.subr.mxu0 0.0
        %308 = vmatpush1.msra.mxu0 0.0
        %309 = vmatprep.subr.mxu0 0.0
        %310 = vmatpush1.msra.mxu0 0.0
        %311 = vmatprep.subr.mxu0 0.0
        %312 = vmatpush1.msra.mxu0 0.0
        %313 = vmatprep.subr.mxu0 0.0
        %314 = vmatpush1.msra.mxu0 0.0
        %315 = vmatprep.subr.mxu0 0.0
        %316 = vmatpush1.msra.mxu0 0.0
        %317 = vmatprep.subr.mxu0 0.0
        %318 = vmatpush1.msra.mxu0 0.0
        %319 = vmatprep.subr.mxu0 0.0
        %320 = vmatpush1.msra.mxu0 0.0
        %321 = vmatprep.subr.mxu0 0.0
        %322 = vmatpush1.msra.mxu0 0.0
        %323 = vmatprep.subr.mxu0 0.0
        %324 = vmatpush1.msra.mxu0 0.0
        %325 = vmatprep.mubr.f32.mxu0 0.0
        %326 = vmatmul.mubr.f32.gmra.mrb[0].mxu0 %v256
        %v327 = vpop.f32.mrb[0].mxu0
        %v328 = vadd.f32 %v252, %v327
        %v329 = vpop.f32.mrb[0].mxu0
        %330 = vmatprep.mubr.f32.mxu0 0.0
        %331 = vmatmul.mubr.f32.gmra.mrb[0].mxu0 %v259
        %v332 = vpop.f32.mrb[0].mxu0
        %v333 = vadd.f32 %v252, %v332
        %v334 = vpop.f32.mrb[0].mxu0
        %335 = vdwg.mxu0
        %s336 = smul.u32 %s24, 128
        %s337 = sshra.s32 %s336, 7
        %s338 = sand.u32 %s336, 127
        %s339 = smul.addr %s337, 8
        %s340 = scalar_lea.vmem [#allocation9], %s339
        %341 = vst [vmem:[%s340] sm:$0xff] %v328
        %342 = vst [vmem:[%s340 + $0x18] sm:$0xff] %v333
        %v343 = vld [vmem:[#allocation2] sm:$0xff]
        %v344 = vld [vmem:[#allocation2 + $0x8] sm:$0xff]
        %345 = vmax.xlane.f32.xlu0 %v328
        %v346 = vpop.xlane.xlu0 %345
        %347 = vmax.xlane.f32.xlu0 %v333
        %v348 = vpop.xlane.xlu0 %347
        %v349 = vmax.f32 %v343, %v346
        %v350 = vmax.f32 %v344, %v348
        %v351 = vld [vmem:[#allocation3] sm:$0xff]
        %v352 = vld [vmem:[#allocation3 + $0x8] sm:$0xff]
        %v353 = vsub.f32 %v343, %v349
        %v354 = vsub.f32 %v344, %v350
        %v355 = vmul.f32 %v353, 1.442695
        %v356 = vpow.pop %v355
        %v357 = vmul.f32 %v354, 1.442695
        %v358 = vpow.pop %v357
        %v359 = vmul.f32 %v351, %v356
        %v360 = vmul.f32 %v352, %v358
        %362 = vset.pattern.permute.xlu0 0
        %363 = vperm.xlu0 %362, %v349
        %v364 = vpop.permute.xlu0 %363
        %367 = vset.pattern.permute.xlu0 0
        %368 = vperm.xlu0 %367, %v350
        %v369 = vpop.permute.xlu0 %368
        %v371 = vsub.f32 %v328, %v364
        %v372 = vsub.f32 %v333, %v369
        %v373 = vmul.f32 %v371, 1.442695
        %v374 = vpow.pop %v373
        %v375 = vmul.f32 %v372, 1.442695
        %v376 = vpow.pop %v375
        %377 = vadd.xlane.f32.xlu0 %v374
        %v378 = vpop.xlane.xlu0 %377
        %379 = vadd.xlane.f32.xlu0 %v376
        %v380 = vpop.xlane.xlu0 %379
        %v381 = vadd.f32 %v359, %v378
        %v382 = vadd.f32 %v360, %v380
        %vm383 = vcmask 7168
        %384 = vst.msk [vmem:[#allocation3] sm:$0xff] %vm383, %v381
        %385 = vst.msk [vmem:[#allocation3 + $0x8] sm:$0xff] %vm383, %v382
        %386 = vst.msk [vmem:[#allocation2] sm:$0xff] %vm383, %v349
        %387 = vst.msk [vmem:[#allocation2 + $0x8] sm:$0xff] %vm383, %v350
        %p388 = scmp.eq.s32.totalorder %s24, 2
        // Predicated region
        $region45: #{tpu_custom_call.1} parent=31 // pred_check
          %p389 = pneg %p388
        $region46: #{tpu_custom_call.1} parent=31 // pred_check_branch
          %391 = sbr.rel (%p389) target = $region48
        $region47: #{tpu_custom_call.1} parent=31 // pred_region
          %v392 = vld [vmem:[#allocation2] sm:$0xff]
          %v393 = vld [vmem:[#allocation2 + $0x8] sm:$0xff]
          %v394 = vld [vmem:[#allocation3] sm:$0xff]
          %v395 = vld [vmem:[#allocation3 + $0x8] sm:$0xff]
          %v396 = vlog2.pop %v394
          %v397 = vmul.f32 %v396, 0.6931472
          %v398 = vlog2.pop %v395
          %v399 = vmul.f32 %v398, 0.6931472
          %v400 = vadd.f32 %v392, %v397
          %v401 = vadd.f32 %v393, %v399
          %v402 = vld [vmem:[#allocation9] sm:$0xff]
          %v403 = vld [vmem:[#allocation9 + $0x8] sm:$0xff]
          %v404 = vld [vmem:[#allocation9 + $0x10] sm:$0xff]
          %v405 = vld [vmem:[#allocation9 + $0x18] sm:$0xff]
          %v406 = vld [vmem:[#allocation9 + $0x20] sm:$0xff]
          %v407 = vld [vmem:[#allocation9 + $0x28] sm:$0xff]
          %409 = vset.pattern.permute.xlu0 0
          %410 = vperm.xlu0 %409, %v400
          %v411 = vpop.permute.xlu0 %410
          %414 = vset.pattern.permute.xlu0 0
          %415 = vperm.xlu0 %414, %v401
          %v416 = vpop.permute.xlu0 %415
          %v418 = vsub.f32 %v402, %v411
          %v419 = vsub.f32 %v403, %v411
          %v420 = vsub.f32 %v404, %v411
          %v421 = vsub.f32 %v405, %v416
          %v422 = vsub.f32 %v406, %v416
          %v423 = vsub.f32 %v407, %v416
          %424 = vst [vmem:[#allocation9] sm:$0xff] %v418
          %425 = vst [vmem:[#allocation9 + $0x8] sm:$0xff] %v419
          %426 = vst [vmem:[#allocation9 + $0x10] sm:$0xff] %v420
          %427 = vst [vmem:[#allocation9 + $0x18] sm:$0xff] %v421
          %428 = vst [vmem:[#allocation9 + $0x20] sm:$0xff] %v422
          %429 = vst [vmem:[#allocation9 + $0x28] sm:$0xff] %v423
        $region48: #{tpu_custom_call.1} parent=31 // pred_fallthru
          _
        // Predicated region
        $region49: #{tpu_custom_call.1} parent=31 // pred_check
          %p430 = pneg %p127
        $region50: #{tpu_custom_call.1} parent=31 // pred_check_branch
          %432 = sbr.rel (%p430) target = $region52
        $region51: #{tpu_custom_call.1} parent=31 // pred_region
          %s433 = smul.u32 2, %s23
          %s435 = ssub.s32 768, 768
          %436 = vsyncadd [#allocation6], %s435
          %s437 = smul.addr %s433, 3
          %s438 = smul.addr %s437, 128
          %s439 = scalar_lea.hbm %s3, %s438
          %s440 = sshll.u32 [#allocation9], 4
          %s441 = int_to_ptr.vmem [resolvable:$true] %s440
          %446 = dma.vmem_to_hbm [thread:$0]  %s441, 768, %s439, [#allocation6], 384, 384, 24
        $region52: #{tpu_custom_call.1} parent=31 // pred_fallthru
          _
        // Predicated region
        $region53: #{tpu_custom_call.1} parent=31 // pred_check
          %p447 = pneg %p127
        $region54: #{tpu_custom_call.1} parent=31 // pred_check_branch
          %449 = sbr.rel (%p447) target = $region56
        $region55: #{tpu_custom_call.1} parent=31 // pred_region
          %450 = dma.done [#allocation6], 768
        $region56: #{tpu_custom_call.1} parent=31 // pred_fallthru
          _
      $region32: #{tpu_custom_call.1} parent=5 // pred_fallthru
        _
      %p451 = scmp.le.s32.totalorder 2, %s14
      // Predicated region
      $region57: #{tpu_custom_call.1} parent=5 // pred_check
        %p452 = pneg %p451
      $region58: #{tpu_custom_call.1} parent=5 // pred_check_branch
        %454 = sbr.rel (%p452) target = $region60
      $region59: #{tpu_custom_call.1} parent=5 // pred_region
        %s455 = ssub.s32 %s14, 2
      $region60: #{tpu_custom_call.1} parent=5 // pred_fallthru
        _
    $region6: #{tpu_custom_call.1} parent=1 // loop_footer
      %s18 = sadd.s32 1, %s14
    $region7: #{tpu_custom_call.1} parent=1 // loop_footer_branch
      %13 = sbr.rel target = $region3
    $region8: #{tpu_custom_call.1} parent=1 // loop_exit
      _
    %456 = vsyncpa [#allocation5], 1
    %s457 = scalar_lea.sflag [#allocation5], 1
    %458 = vsyncpa %s457, 1
    %459 = vsyncpa [#allocation8], 1
    %s460 = scalar_lea.sflag [#allocation8], 1
    %461 = vsyncpa %s460, 1
    %462 = vsyncpa [#allocation6], 1
    %s463 = scalar_lea.sflag [#allocation6], 1
    %464 = vsyncpa %s463, 1

</llo_original>
